<compile_context>
chip_gen: v7x
topology: tpu7x:2x2x1
jax: 0.10.0
libtpu: 0.0.40
codegen_flags: <defaults>
</compile_context>

<pallas_src>
import functools

import jax
import jax.numpy as jnp
from jax.experimental import pallas as pl
from jax.experimental.pallas import tpu as pltpu


def _round_up(n: int, m: int) -> int:
    return ((n + m - 1) // m) * m


def elman_rnn_kernel(x_ref, wih_ref, whh_ref, b_ref, wfc_ref, bfc_ref,
                     out_ref, xp_ref, *, seq_len: int):
    """x_ref:  (T*Bp, I)   time-major flattened input (batch-padded, native I)
       wih_ref:(I, Hp)     W_ih^T, lane-padded
       whh_ref:(Hp, Hp)    W_hh^T
       b_ref:  (1, Hp)     b_ih + b_hh (f32)
       wfc_ref:(Hp, Op)    W_fc^T
       bfc_ref:(1, Op)     b_fc (f32)
       out_ref:(Bp, Op)    logits (f32)
       xp_ref: (T*Bp, Hp)  VMEM scratch for the hoisted input projection (f32)
    """
    batch = x_ref.shape[0] // seq_len          # Bp (static, multiple of 8)
    hidden = whh_ref.shape[1]                  # Hp (static, multiple of 128)

    # --- Phase 1: hoisted input projection, one big MXU matmul --------------
    xp_ref[...] = (jnp.dot(x_ref[...], wih_ref[...],
                           preferred_element_type=jnp.float32)
                   + b_ref[...])

    # --- Phase 2: serial recurrence; W_hh loaded once (loop-invariant) ------
    whh = whh_ref[...]
    mm_dtype = whh.dtype                       # bf16 or f32 operands; f32 acc

    def step(t, h):
        start = pl.multiple_of(t * batch, batch)           # sublane-aligned
        x_t = xp_ref[pl.ds(start, batch), :]                # (Bp, Hp) f32
        pre = x_t + jnp.dot(h.astype(mm_dtype), whh,
                            preferred_element_type=jnp.float32)
        return jnp.tanh(pre)                                # f32 tanh on EUP

    h0 = jnp.zeros((batch, hidden), jnp.float32)
    unroll = seq_len if seq_len <= 16 else 8   # cap unroll for long sequences
    h_last = jax.lax.fori_loop(0, seq_len, step, h0, unroll=unroll)

    # --- Phase 3: FC head on the final hidden state (lane-dense store) ------
    logits = (jnp.dot(h_last.astype(wfc_ref.dtype), wfc_ref[...],
                      preferred_element_type=jnp.float32)
              + bfc_ref[...])
    out_ref[...] = logits.astype(out_ref.dtype)


def elman_rnn_forward(x, w_ih, w_hh, b_ih, b_hh, w_fc, b_fc,
                      *, matmul_dtype=jnp.float32):
    """x: (B, T, I) float32.  Weights in PyTorch convention:
       w_ih (H, I), w_hh (H, H), b_ih (H,), b_hh (H,), w_fc (O, H), b_fc (O,)."""
    B, T, I = x.shape
    H = w_hh.shape[0]
    O = w_fc.shape[0]

    Bp = _round_up(max(B, 8), 8)     # sublane multiple
    Hp = _round_up(H, 128)           # lane multiples (keep minimal: 128)
    Op = _round_up(O, 128)

    # Time-major, batch-padded input slab (T*Bp, I).  Feature dim kept native.
    x_tm = jnp.transpose(x, (1, 0, 2)).astype(jnp.float32)       # (T, B, I)
    x_tm = jnp.pad(x_tm, ((0, 0), (0, Bp - B), (0, 0)))          # (T, Bp, I)
    x_2d = x_tm.reshape(T * Bp, I).astype(matmul_dtype)

    # Padded / transposed weights (zero padding is exact, see header comment).
    wih_t = jnp.pad(w_ih.T, ((0, 0), (0, Hp - H))).astype(matmul_dtype)
    whh_t = jnp.pad(w_hh.T, ((0, Hp - H), (0, Hp - H))).astype(matmul_dtype)
    b = jnp.pad((b_ih + b_hh).reshape(1, H).astype(jnp.float32),
                ((0, 0), (0, Hp - H)))
    wfc_t = jnp.pad(w_fc.T, ((0, Hp - H), (0, Op - O))).astype(matmul_dtype)
    bfc = jnp.pad(b_fc.reshape(1, O).astype(jnp.float32),
                  ((0, 0), (0, Op - O)))

    kernel = functools.partial(elman_rnn_kernel, seq_len=T)

    out_padded = pl.pallas_call(
        kernel,
        out_shape=jax.ShapeDtypeStruct((Bp, Op), jnp.float32),
        in_specs=[pl.BlockSpec(memory_space=pltpu.MemorySpace.VMEM)] * 6,
        out_specs=pl.BlockSpec(memory_space=pltpu.MemorySpace.VMEM),
        scratch_shapes=[pltpu.VMEM((T * Bp, Hp), jnp.float32)],   # x_proj
    )(x_2d, wih_t, whh_t, b, wfc_t, bfc)

    return out_padded[:B, :O]


def elman_rnn_reference(x, w_ih, w_hh, b_ih, b_hh, w_fc, b_fc):
    """Pure-JAX reference mirroring torch nn.RNN(tanh) + Linear semantics."""
    B = x.shape[0]
    H = w_hh.shape[0]
    h = jnp.zeros((B, H), jnp.float32)

    def step(h, x_t):
        h_new = jnp.tanh(x_t @ w_ih.T + b_ih + h @ w_hh.T + b_hh)
        return h_new, None

    h_last, _ = jax.lax.scan(step, h, jnp.transpose(x, (1, 0, 2)))
    return h_last @ w_fc.T + b_fc


if __name__ == "__main__":
    B, T, I, H, O = 2, 8, 16, 32, 8

    key = jax.random.PRNGKey(0)
    k = jax.random.split(key, 7)
    bound = 1.0 / (H ** 0.5)
    w_ih = jax.random.uniform(k[0], (H, I), jnp.float32, -bound, bound)
    w_hh = jax.random.uniform(k[1], (H, H), jnp.float32, -bound, bound)
    b_ih = jax.random.uniform(k[2], (H,), jnp.float32, -bound, bound)
    b_hh = jax.random.uniform(k[3], (H,), jnp.float32, -bound, bound)
    w_fc = jax.random.uniform(k[4], (O, H), jnp.float32, -bound, bound)
    b_fc = jax.random.uniform(k[5], (O,), jnp.float32, -bound, bound)
    x = jax.random.normal(k[6], (B, T, I), jnp.float32)

    ref = elman_rnn_reference(x, w_ih, w_hh, b_ih, b_hh, w_fc, b_fc)

    # f32-operand path: bit-for-bit comparable to the reference tolerance.
    out_f32 = elman_rnn_forward(x, w_ih, w_hh, b_ih, b_hh, w_fc, b_fc,
                                matmul_dtype=jnp.float32)
    out_f32 = jax.block_until_ready(out_f32)
    assert out_f32.shape == (B, O)
    assert jnp.allclose(out_f32, ref, atol=1e-5, rtol=1e-5), \
        "f32 kernel mismatch vs reference"

    # bf16-operand / f32-accumulation path (single MXU pass per step); the
    # recurrence is error-amplifying, so check at a loose tolerance.
    out_bf16 = elman_rnn_forward(x, w_ih, w_hh, b_ih, b_hh, w_fc, b_fc,
                                 matmul_dtype=jnp.bfloat16)
    out_bf16 = jax.block_until_ready(out_bf16)
    assert out_bf16.shape == (B, O)
    assert jnp.allclose(out_bf16, ref, atol=5e-2, rtol=5e-2), \
        "bf16 kernel mismatch vs reference"

    print("KERNEL_OK")
</pallas_src>

<mosaic_0001>
module attributes {stable_mosaic.version = 11 : i64} {
  func.func @elman_rnn_kernel(%arg0: memref<64x16xf32, #tpu.memory_space<vmem>>, %arg1: memref<16x128xf32, #tpu.memory_space<vmem>>, %arg2: memref<128x128xf32, #tpu.memory_space<vmem>>, %arg3: memref<1x128xf32, #tpu.memory_space<vmem>>, %arg4: memref<128x128xf32, #tpu.memory_space<vmem>>, %arg5: memref<1x128xf32, #tpu.memory_space<vmem>>, %arg6: memref<8x128xf32, #tpu.memory_space<vmem>>, %arg7: memref<64x128xf32, #tpu.memory_space<vmem>>) attributes {dimension_semantics = [], scalar_prefetch = 0 : i64, scratch_operands = 1 : i64, tpu.core_type = #tpu.core_type<tc>} {
    %c0 = arith.constant 0 : index
    %c0_0 = arith.constant 0 : index
    %0 = vector.load %arg0[%c0, %c0_0] : memref<64x16xf32, #tpu.memory_space<vmem>>, vector<64x16xf32>
    %c0_1 = arith.constant 0 : index
    %c0_2 = arith.constant 0 : index
    %1 = vector.load %arg1[%c0_1, %c0_2] : memref<16x128xf32, #tpu.memory_space<vmem>>, vector<16x128xf32>
    %cst = arith.constant dense<0.000000e+00> : vector<64x128xf32>
    %2 = tpu.matmul %0, %1, %cst {dimension_numbers = #tpu.dot_dimension_numbers<[1], [0], [0], [1], [0, 0, 1, 1], [], []>} : vector<64x16xf32>, vector<16x128xf32>, vector<64x128xf32> -> vector<64x128xf32>
    %c0_3 = arith.constant 0 : index
    %c0_4 = arith.constant 0 : index
    %3 = vector.load %arg3[%c0_3, %c0_4] : memref<1x128xf32, #tpu.memory_space<vmem>>, vector<1x128xf32>
    %4 = vector.broadcast %3 : vector<1x128xf32> to vector<64x128xf32>
    %5 = arith.addf %2, %4 : vector<64x128xf32>
    %c0_5 = arith.constant 0 : index
    %c0_6 = arith.constant 0 : index
    %6 = vector.load %arg7[%c0_5, %c0_6] : memref<64x128xf32, #tpu.memory_space<vmem>>, vector<64x128xf32>
    tpu.vector_store %arg7[%c0_5, %c0_6], %5 {strides = array<i32>} : memref<64x128xf32, #tpu.memory_space<vmem>>, vector<64x128xf32>,
    %c0_7 = arith.constant 0 : index
    %c0_8 = arith.constant 0 : index
    %7 = vector.load %arg2[%c0_7, %c0_8] : memref<128x128xf32, #tpu.memory_space<vmem>>, vector<128x128xf32>
    %cst_9 = arith.constant 0.000000e+00 : f32
    %8 = vector.broadcast %cst_9 : f32 to vector<8x128xf32>
    %c0_i32 = arith.constant 0 : i32
    %c8_i32 = arith.constant 8 : i32
    %9 = arith.muli %c0_i32, %c8_i32 : i32
    %10 = tpu.assume_multiple %9, 8 : i32
    %11 = arith.index_cast %10 : i32 to index
    %c0_10 = arith.constant 0 : index
    %12 = vector.load %arg7[%11, %c0_10] : memref<64x128xf32, #tpu.memory_space<vmem>>, vector<8x128xf32>
    %cst_11 = arith.constant dense<0.000000e+00> : vector<8x128xf32>
    %13 = tpu.matmul %8, %7, %cst_11 {dimension_numbers = #tpu.dot_dimension_numbers<[1], [0], [0], [1], [0, 0, 1, 1], [], []>} : vector<8x128xf32>, vector<128x128xf32>, vector<8x128xf32> -> vector<8x128xf32>
    %14 = arith.addf %12, %13 : vector<8x128xf32>
    %15 = math.tanh %14 : vector<8x128xf32>
    %c1_i32 = arith.constant 1 : i32
    %c8_i32_12 = arith.constant 8 : i32
    %16 = arith.muli %c1_i32, %c8_i32_12 : i32
    %17 = tpu.assume_multiple %16, 8 : i32
    %18 = arith.index_cast %17 : i32 to index
    %c0_13 = arith.constant 0 : index
    %19 = vector.load %arg7[%18, %c0_13] : memref<64x128xf32, #tpu.memory_space<vmem>>, vector<8x128xf32>
    %cst_14 = arith.constant dense<0.000000e+00> : vector<8x128xf32>
    %20 = tpu.matmul %15, %7, %cst_14 {dimension_numbers = #tpu.dot_dimension_numbers<[1], [0], [0], [1], [0, 0, 1, 1], [], []>} : vector<8x128xf32>, vector<128x128xf32>, vector<8x128xf32> -> vector<8x128xf32>
    %21 = arith.addf %19, %20 : vector<8x128xf32>
    %22 = math.tanh %21 : vector<8x128xf32>
    %c2_i32 = arith.constant 2 : i32
    %c8_i32_15 = arith.constant 8 : i32
    %23 = arith.muli %c2_i32, %c8_i32_15 : i32
    %24 = tpu.assume_multiple %23, 8 : i32
    %25 = arith.index_cast %24 : i32 to index
    %c0_16 = arith.constant 0 : index
    %26 = vector.load %arg7[%25, %c0_16] : memref<64x128xf32, #tpu.memory_space<vmem>>, vector<8x128xf32>
    %cst_17 = arith.constant dense<0.000000e+00> : vector<8x128xf32>
    %27 = tpu.matmul %22, %7, %cst_17 {dimension_numbers = #tpu.dot_dimension_numbers<[1], [0], [0], [1], [0, 0, 1, 1], [], []>} : vector<8x128xf32>, vector<128x128xf32>, vector<8x128xf32> -> vector<8x128xf32>
    %28 = arith.addf %26, %27 : vector<8x128xf32>
    %29 = math.tanh %28 : vector<8x128xf32>
    %c3_i32 = arith.constant 3 : i32
    %c8_i32_18 = arith.constant 8 : i32
    %30 = arith.muli %c3_i32, %c8_i32_18 : i32
    %31 = tpu.assume_multiple %30, 8 : i32
    %32 = arith.index_cast %31 : i32 to index
    %c0_19 = arith.constant 0 : index
    %33 = vector.load %arg7[%32, %c0_19] : memref<64x128xf32, #tpu.memory_space<vmem>>, vector<8x128xf32>
    %cst_20 = arith.constant dense<0.000000e+00> : vector<8x128xf32>
    %34 = tpu.matmul %29, %7, %cst_20 {dimension_numbers = #tpu.dot_dimension_numbers<[1], [0], [0], [1], [0, 0, 1, 1], [], []>} : vector<8x128xf32>, vector<128x128xf32>, vector<8x128xf32> -> vector<8x128xf32>
    %35 = arith.addf %33, %34 : vector<8x128xf32>
    %36 = math.tanh %35 : vector<8x128xf32>
    %c4_i32 = arith.constant 4 : i32
    %c8_i32_21 = arith.constant 8 : i32
    %37 = arith.muli %c4_i32, %c8_i32_21 : i32
    %38 = tpu.assume_multiple %37, 8 : i32
    %39 = arith.index_cast %38 : i32 to index
    %c0_22 = arith.constant 0 : index
    %40 = vector.load %arg7[%39, %c0_22] : memref<64x128xf32, #tpu.memory_space<vmem>>, vector<8x128xf32>
    %cst_23 = arith.constant dense<0.000000e+00> : vector<8x128xf32>
    %41 = tpu.matmul %36, %7, %cst_23 {dimension_numbers = #tpu.dot_dimension_numbers<[1], [0], [0], [1], [0, 0, 1, 1], [], []>} : vector<8x128xf32>, vector<128x128xf32>, vector<8x128xf32> -> vector<8x128xf32>
    %42 = arith.addf %40, %41 : vector<8x128xf32>
    %43 = math.tanh %42 : vector<8x128xf32>
    %c5_i32 = arith.constant 5 : i32
    %c8_i32_24 = arith.constant 8 : i32
    %44 = arith.muli %c5_i32, %c8_i32_24 : i32
    %45 = tpu.assume_multiple %44, 8 : i32
    %46 = arith.index_cast %45 : i32 to index
    %c0_25 = arith.constant 0 : index
    %47 = vector.load %arg7[%46, %c0_25] : memref<64x128xf32, #tpu.memory_space<vmem>>, vector<8x128xf32>
    %cst_26 = arith.constant dense<0.000000e+00> : vector<8x128xf32>
    %48 = tpu.matmul %43, %7, %cst_26 {dimension_numbers = #tpu.dot_dimension_numbers<[1], [0], [0], [1], [0, 0, 1, 1], [], []>} : vector<8x128xf32>, vector<128x128xf32>, vector<8x128xf32> -> vector<8x128xf32>
    %49 = arith.addf %47, %48 : vector<8x128xf32>
    %50 = math.tanh %49 : vector<8x128xf32>
    %c6_i32 = arith.constant 6 : i32
    %c8_i32_27 = arith.constant 8 : i32
    %51 = arith.muli %c6_i32, %c8_i32_27 : i32
    %52 = tpu.assume_multiple %51, 8 : i32
    %53 = arith.index_cast %52 : i32 to index
    %c0_28 = arith.constant 0 : index
    %54 = vector.load %arg7[%53, %c0_28] : memref<64x128xf32, #tpu.memory_space<vmem>>, vector<8x128xf32>
    %cst_29 = arith.constant dense<0.000000e+00> : vector<8x128xf32>
    %55 = tpu.matmul %50, %7, %cst_29 {dimension_numbers = #tpu.dot_dimension_numbers<[1], [0], [0], [1], [0, 0, 1, 1], [], []>} : vector<8x128xf32>, vector<128x128xf32>, vector<8x128xf32> -> vector<8x128xf32>
    %56 = arith.addf %54, %55 : vector<8x128xf32>
    %57 = math.tanh %56 : vector<8x128xf32>
    %c7_i32 = arith.constant 7 : i32
    %c8_i32_30 = arith.constant 8 : i32
    %58 = arith.muli %c7_i32, %c8_i32_30 : i32
    %59 = tpu.assume_multiple %58, 8 : i32
    %60 = arith.index_cast %59 : i32 to index
    %c0_31 = arith.constant 0 : index
    %61 = vector.load %arg7[%60, %c0_31] : memref<64x128xf32, #tpu.memory_space<vmem>>, vector<8x128xf32>
    %cst_32 = arith.constant dense<0.000000e+00> : vector<8x128xf32>
    %62 = tpu.matmul %57, %7, %cst_32 {dimension_numbers = #tpu.dot_dimension_numbers<[1], [0], [0], [1], [0, 0, 1, 1], [], []>} : vector<8x128xf32>, vector<128x128xf32>, vector<8x128xf32> -> vector<8x128xf32>
    %63 = arith.addf %61, %62 : vector<8x128xf32>
    %64 = math.tanh %63 : vector<8x128xf32>
    %c8_i32_33 = arith.constant 8 : i32
    %c0_34 = arith.constant 0 : index
    %c0_35 = arith.constant 0 : index
    %65 = vector.load %arg4[%c0_34, %c0_35] : memref<128x128xf32, #tpu.memory_space<vmem>>, vector<128x128xf32>
    %cst_36 = arith.constant dense<0.000000e+00> : vector<8x128xf32>
    %66 = tpu.matmul %64, %65, %cst_36 {dimension_numbers = #tpu.dot_dimension_numbers<[1], [0], [0], [1], [0, 0, 1, 1], [], []>} : vector<8x128xf32>, vector<128x128xf32>, vector<8x128xf32> -> vector<8x128xf32>
    %c0_37 = arith.constant 0 : index
    %c0_38 = arith.constant 0 : index
    %67 = vector.load %arg5[%c0_37, %c0_38] : memref<1x128xf32, #tpu.memory_space<vmem>>, vector<1x128xf32>
    %68 = vector.broadcast %67 : vector<1x128xf32> to vector<8x128xf32>
    %69 = arith.addf %66, %68 : vector<8x128xf32>
    %c0_39 = arith.constant 0 : index
    %c0_40 = arith.constant 0 : index
    %70 = vector.load %arg6[%c0_39, %c0_40] : memref<8x128xf32, #tpu.memory_space<vmem>>, vector<8x128xf32>
    tpu.vector_store %arg6[%c0_39, %c0_40], %69 {strides = array<i32>} : memref<8x128xf32, #tpu.memory_space<vmem>>, vector<8x128xf32>,
    return
  }
}

</mosaic_0001>

<llo_original>
// kernel: tpu_custom_call.1
$region0: #{tpu_custom_call.1}
  #allocation0 [shape = 'u32[]', space=smem, size = 0x4, offset = 0x4, fixed_abs, tag = 'smem constant byte address 0x4 - core index']
  #allocation1 [shape = 'u32[144,128]{1,0:T(1,128)}', space=vmem, size = 0x12000, scoped, tag = 'internal scratch']
  #allocation2 [shape = 'f32[64,128]{1,0:T(8,128)}', space=vmem, size = 0x8000, scoped, tag = 'scratch operand']
  %s0 = inlined_call_operand.vmem [shape: f32[64,16], index: 0, kind: input, shape index: {}]
  %s1 = inlined_call_operand.vmem [shape: f32[16,128], index: 1, kind: input, shape index: {}]
  %s2 = inlined_call_operand.hbm [shape: f32[128,128], index: 2, kind: input, shape index: {}]
  %s3 = inlined_call_operand.vmem [shape: f32[1,128], index: 3, kind: input, shape index: {}]
  %s4 = inlined_call_operand.hbm [shape: f32[128,128], index: 4, kind: input, shape index: {}]
  %s5 = inlined_call_operand.vmem [shape: f32[1,128], index: 5, kind: input, shape index: {}]
  %s6 = inlined_call_operand.hbm [shape: f32[8,128], index: 6, kind: output, shape index: {}]
  %s7 = sld [smem:[#allocation0]]
  $region42: #{tpu_custom_call.1} parent=0
    _
  %s9 = ssub.s32 1, %s7
  %s10 = scalar_select 0, %s9, %s7
  $region1: #{tpu_custom_call.1} parent=0
    #allocation3 [shape = 'u8[65536]{0}', space=vmem, size = 0x10000, scoped, tag = 'input window, operand 2, single buffered']
    #allocation4 [shape = 's32[1]{0}', space=sflag, size = 0x4, scoped, tag = 'scoped memory for tpu_custom_call.1']
    #allocation5 [shape = 's32[1]{0}', space=sflag, size = 0x4, scoped, tag = 'scoped memory for tpu_custom_call.1']
    #allocation6 [shape = 'u8[65536]{0}', space=vmem, size = 0x10000, scoped, tag = 'input window, operand 4, single buffered']
    #allocation7 [shape = 's32[1]{0}', space=sflag, size = 0x4, scoped, tag = 'scoped memory for tpu_custom_call.1']
    #allocation8 [shape = 'u8[4096]{0}', space=vmem, size = 0x1000, scoped, tag = 'output window, operand 0, single buffered']
    %11 = vsyncpa [#allocation4], 0
    %12 = vsyncpa [#allocation7], 0
    %13 = vsyncpa [#allocation5], 0
    // Predicated region
    $region2: #{tpu_custom_call.1} parent=1 // pred_check
      _
    $region3: #{tpu_custom_call.1} parent=1 // pred_check_branch
      %15 = sbr.rel (0) target = $region5
    $region4: #{tpu_custom_call.1} parent=1 // pred_region
      _
    $region5: #{tpu_custom_call.1} parent=1 // pred_fallthru
      _
    // Predicated region
    $region6: #{tpu_custom_call.1} parent=1 // pred_check
      _
    $region7: #{tpu_custom_call.1} parent=1 // pred_check_branch
      %17 = sbr.rel (0) target = $region9
    $region8: #{tpu_custom_call.1} parent=1 // pred_region
      _
    $region9: #{tpu_custom_call.1} parent=1 // pred_fallthru
      _
    // Predicated region
    $region10: #{tpu_custom_call.1} parent=1 // pred_check
      _
    $region11: #{tpu_custom_call.1} parent=1 // pred_check_branch
      %19 = sbr.rel (0) target = $region13
    $region12: #{tpu_custom_call.1} parent=1 // pred_region
      %s21 = ssub.s32 2048, 2048
      %22 = vsyncadd [#allocation4], %s21
      %s23 = sshll.u32 [#allocation3], 4
      %s24 = int_to_ptr.vmem [resolvable:$true] %s23
      %29 = dma.hbm_to_vmem [thread:$0]  %s2, 2048, %s24, [#allocation4], 128, 128, 8
    $region13: #{tpu_custom_call.1} parent=1 // pred_fallthru
      _
    // Predicated region
    $region14: #{tpu_custom_call.1} parent=1 // pred_check
      _
    $region15: #{tpu_custom_call.1} parent=1 // pred_check_branch
      %31 = sbr.rel (0) target = $region17
    $region16: #{tpu_custom_call.1} parent=1 // pred_region
      _
    $region17: #{tpu_custom_call.1} parent=1 // pred_fallthru
      _
    // Predicated region
    $region18: #{tpu_custom_call.1} parent=1 // pred_check
      _
    $region19: #{tpu_custom_call.1} parent=1 // pred_check_branch
      %33 = sbr.rel (0) target = $region21
    $region20: #{tpu_custom_call.1} parent=1 // pred_region
      %s35 = ssub.s32 2048, 2048
      %36 = vsyncadd [#allocation7], %s35
      %s37 = sshll.u32 [#allocation6], 4
      %s38 = int_to_ptr.vmem [resolvable:$true] %s37
      %43 = dma.hbm_to_vmem [thread:$0]  %s4, 2048, %s38, [#allocation7], 128, 128, 8
    $region21: #{tpu_custom_call.1} parent=1 // pred_fallthru
      _
    // Predicated region
    $region22: #{tpu_custom_call.1} parent=1 // pred_check
      _
    $region23: #{tpu_custom_call.1} parent=1 // pred_check_branch
      %45 = sbr.rel (0) target = $region25
    $region24: #{tpu_custom_call.1} parent=1 // pred_region
      _
    $region25: #{tpu_custom_call.1} parent=1 // pred_fallthru
      _
    // Predicated region
    $region26: #{tpu_custom_call.1} parent=1 // pred_check
      _
    $region27: #{tpu_custom_call.1} parent=1 // pred_check_branch
      %47 = sbr.rel (0) target = $region29
    $region28: #{tpu_custom_call.1} parent=1 // pred_region
      %48 = dma.done [#allocation4], 2048
    $region29: #{tpu_custom_call.1} parent=1 // pred_fallthru
      _
    // Predicated region
    $region30: #{tpu_custom_call.1} parent=1 // pred_check
      _
    $region31: #{tpu_custom_call.1} parent=1 // pred_check_branch
      %50 = sbr.rel (0) target = $region33
    $region32: #{tpu_custom_call.1} parent=1 // pred_region
      %51 = dma.done [#allocation7], 2048
    $region33: #{tpu_custom_call.1} parent=1 // pred_fallthru
      _
    %v52 = vld [vmem:[%s0] sm:$0xff]
    %v53 = vld [vmem:[%s0 + $0x8] sm:$0xff]
    %v54 = vld [vmem:[%s0 + $0x10] sm:$0xff]
    %v55 = vld [vmem:[%s0 + $0x18] sm:$0xff]
    %v56 = vld [vmem:[%s0 + $0x20] sm:$0xff]
    %v57 = vld [vmem:[%s0 + $0x28] sm:$0xff]
    %v58 = vld [vmem:[%s0 + $0x30] sm:$0xff]
    %v59 = vld [vmem:[%s0 + $0x38] sm:$0xff]
    %v60 = vld [vmem:[%s1] sm:$0xff]
    %v61 = vld [vmem:[%s1 + $0x8] sm:$0xff]
    %v62 = vld [vmem:[%s3] sm:$0x1]
    %v64 = vlaneseq
    %v65 = vshrl.u32 %v64, 7
    %v66 = vsub.s32 0, %v65
    %v67 = vrot.slane %v62, %v66
    %vm69 = vcmask 130048
    %v71 = vsel %vm69, %v52, 0
    %v74 = vsel %vm69, %v53, 0
    %v77 = vsel %vm69, %v54, 0
    %v80 = vsel %vm69, %v55, 0
    %v83 = vsel %vm69, %v56, 0
    %v86 = vsel %vm69, %v57, 0
    %v89 = vsel %vm69, %v58, 0
    %v92 = vsel %vm69, %v59, 0
    %94 = vmatprep.subr.mxu0 0.0
    %95 = vmatpush1.msra.mxu0 %v60
    %96 = vmatprep.subr.mxu0 0.0
    %97 = vmatpush1.msra.mxu0 %v61
    %98 = vmatprep.subr.mxu0 0.0
    %99 = vmatpush1.msra.mxu0 0.0
    %100 = vmatprep.subr.mxu0 0.0
    %101 = vmatpush1.msra.mxu0 0.0
    %102 = vmatprep.subr.mxu0 0.0
    %103 = vmatpush1.msra.mxu0 0.0
    %104 = vmatprep.subr.mxu0 0.0
    %105 = vmatpush1.msra.mxu0 0.0
    %106 = vmatprep.subr.mxu0 0.0
    %107 = vmatpush1.msra.mxu0 0.0
    %108 = vmatprep.subr.mxu0 0.0
    %109 = vmatpush1.msra.mxu0 0.0
    %110 = vmatprep.subr.mxu0 0.0
    %111 = vmatpush1.msra.mxu0 0.0
    %112 = vmatprep.subr.mxu0 0.0
    %113 = vmatpush1.msra.mxu0 0.0
    %114 = vmatprep.subr.mxu0 0.0
    %115 = vmatpush1.msra.mxu0 0.0
    %116 = vmatprep.subr.mxu0 0.0
    %117 = vmatpush1.msra.mxu0 0.0
    %118 = vmatprep.subr.mxu0 0.0
    %119 = vmatpush1.msra.mxu0 0.0
    %120 = vmatprep.subr.mxu0 0.0
    %121 = vmatpush1.msra.mxu0 0.0
    %122 = vmatprep.subr.mxu0 0.0
    %123 = vmatpush1.msra.mxu0 0.0
    %124 = vmatprep.subr.mxu0 0.0
    %125 = vmatpush1.msra.mxu0 0.0
    %126 = vmatprep.subr.mxu0 0.0
    %127 = vmatpush1.msra.mxu0 0.0
    %128 = vmatprep.subr.mxu0 0.0
    %129 = vmatpush1.msra.mxu0 0.0
    %130 = vmatprep.subr.mxu0 0.0
    %131 = vmatpush1.msra.mxu0 0.0
    %132 = vmatprep.subr.mxu0 0.0
    %133 = vmatpush1.msra.mxu0 0.0
    %134 = vmatprep.subr.mxu0 0.0
    %135 = vmatpush1.msra.mxu0 0.0
    %136 = vmatprep.subr.mxu0 0.0
    %137 = vmatpush1.msra.mxu0 0.0
    %138 = vmatprep.subr.mxu0 0.0
    %139 = vmatpush1.msra.mxu0 0.0
    %140 = vmatprep.subr.mxu0 0.0
    %141 = vmatpush1.msra.mxu0 0.0
    %142 = vmatprep.subr.mxu0 0.0
    %143 = vmatpush1.msra.mxu0 0.0
    %144 = vmatprep.subr.mxu0 0.0
    %145 = vmatpush1.msra.mxu0 0.0
    %146 = vmatprep.subr.mxu0 0.0
    %147 = vmatpush1.msra.mxu0 0.0
    %148 = vmatprep.subr.mxu0 0.0
    %149 = vmatpush1.msra.mxu0 0.0
    %150 = vmatprep.subr.mxu0 0.0
    %151 = vmatpush1.msra.mxu0 0.0
    %152 = vmatprep.subr.mxu0 0.0
    %153 = vmatpush1.msra.mxu0 0.0
    %154 = vmatprep.subr.mxu0 0.0
    %155 = vmatpush1.msra.mxu0 0.0
    %156 = vmatprep.subr.mxu0 0.0
    %157 = vmatpush1.msra.mxu0 0.0
    %158 = vmatprep.mubr.f32.mxu0 0.0
    %159 = vmatmul.mubr.f32.gmra.mrb[0].mxu0 %v71
    %v160 = vpop.f32.mrb[0].mxu0
    %v161 = vadd.f32 %v67, %v160
    %v162 = vpop.f32.mrb[0].mxu0
    %163 = vmatprep.mubr.f32.mxu0 0.0
    %164 = vmatmul.mubr.f32.gmra.mrb[0].mxu0 %v74
    %v165 = vpop.f32.mrb[0].mxu0
    %v166 = vadd.f32 %v67, %v165
    %v167 = vpop.f32.mrb[0].mxu0
    %168 = vmatprep.mubr.f32.mxu0 0.0
    %169 = vmatmul.mubr.f32.gmra.mrb[0].mxu0 %v77
    %v170 = vpop.f32.mrb[0].mxu0
    %v171 = vadd.f32 %v67, %v170
    %v172 = vpop.f32.mrb[0].mxu0
    %173 = vmatprep.mubr.f32.mxu0 0.0
    %174 = vmatmul.mubr.f32.gmra.mrb[0].mxu0 %v80
    %v175 = vpop.f32.mrb[0].mxu0
    %v176 = vadd.f32 %v67, %v175
    %v177 = vpop.f32.mrb[0].mxu0
    %178 = vmatprep.mubr.f32.mxu0 0.0
    %179 = vmatmul.mubr.f32.gmra.mrb[0].mxu0 %v83
    %v180 = vpop.f32.mrb[0].mxu0
    %v181 = vadd.f32 %v67, %v180
    %v182 = vpop.f32.mrb[0].mxu0
    %183 = vmatprep.mubr.f32.mxu0 0.0
    %184 = vmatmul.mubr.f32.gmra.mrb[0].mxu0 %v86
    %v185 = vpop.f32.mrb[0].mxu0
    %v186 = vadd.f32 %v67, %v185
    %v187 = vpop.f32.mrb[0].mxu0
    %188 = vmatprep.mubr.f32.mxu0 0.0
    %189 = vmatmul.mubr.f32.gmra.mrb[0].mxu0 %v89
    %v190 = vpop.f32.mrb[0].mxu0
    %v191 = vadd.f32 %v67, %v190
    %v192 = vpop.f32.mrb[0].mxu0
    %193 = vmatprep.mubr.f32.mxu0 0.0
    %194 = vmatmul.mubr.f32.gmra.mrb[0].mxu0 %v92
    %v195 = vpop.f32.mrb[0].mxu0
    %v196 = vadd.f32 %v67, %v195
    %v197 = vpop.f32.mrb[0].mxu0
    %198 = vdwg.mxu0
    %199 = vst [vmem:[#allocation2] sm:$0xff] %v161
    %200 = vst [vmem:[#allocation2 + $0x8] sm:$0xff] %v166
    %201 = vst [vmem:[#allocation2 + $0x10] sm:$0xff] %v171
    %202 = vst [vmem:[#allocation2 + $0x18] sm:$0xff] %v176
    %203 = vst [vmem:[#allocation2 + $0x20] sm:$0xff] %v181
    %204 = vst [vmem:[#allocation2 + $0x28] sm:$0xff] %v186
    %205 = vst [vmem:[#allocation2 + $0x30] sm:$0xff] %v191
    %206 = vst [vmem:[#allocation2 + $0x38] sm:$0xff] %v196
    %v207 = vld [vmem:[#allocation3] sm:$0xff]
    %v208 = vld [vmem:[#allocation3 + $0x8] sm:$0xff]
    %v209 = vld [vmem:[#allocation3 + $0x10] sm:$0xff]
    %v210 = vld [vmem:[#allocation3 + $0x18] sm:$0xff]
    %v211 = vld [vmem:[#allocation3 + $0x20] sm:$0xff]
    %v212 = vld [vmem:[#allocation3 + $0x28] sm:$0xff]
    %v213 = vld [vmem:[#allocation3 + $0x30] sm:$0xff]
    %v214 = vld [vmem:[#allocation3 + $0x38] sm:$0xff]
    %v215 = vld [vmem:[#allocation3 + $0x40] sm:$0xff]
    %v216 = vld [vmem:[#allocation3 + $0x48] sm:$0xff]
    %v217 = vld [vmem:[#allocation3 + $0x50] sm:$0xff]
    %v218 = vld [vmem:[#allocation3 + $0x58] sm:$0xff]
    %v219 = vld [vmem:[#allocation3 + $0x60] sm:$0xff]
    %v220 = vld [vmem:[#allocation3 + $0x68] sm:$0xff]
    %v221 = vld [vmem:[#allocation3 + $0x70] sm:$0xff]
    %v222 = vld [vmem:[#allocation3 + $0x78] sm:$0xff]
    %v223 = vld [vmem:[#allocation2] sm:$0xff]
    %224 = vmatprep.subr.mxu0 0.0
    %225 = vmatpush1.msra.mxu0 %v207
    %226 = vmatprep.subr.mxu0 0.0
    %227 = vmatpush1.msra.mxu0 %v208
    %228 = vmatprep.subr.mxu0 0.0
    %229 = vmatpush1.msra.mxu0 %v209
    %230 = vmatprep.subr.mxu0 0.0
    %231 = vmatpush1.msra.mxu0 %v210
    %232 = vmatprep.subr.mxu0 0.0
    %233 = vmatpush1.msra.mxu0 %v211
    %234 = vmatprep.subr.mxu0 0.0
    %235 = vmatpush1.msra.mxu0 %v212
    %236 = vmatprep.subr.mxu0 0.0
    %237 = vmatpush1.msra.mxu0 %v213
    %238 = vmatprep.subr.mxu0 0.0
    %239 = vmatpush1.msra.mxu0 %v214
    %240 = vmatprep.subr.mxu0 0.0
    %241 = vmatpush1.msra.mxu0 %v215
    %242 = vmatprep.subr.mxu0 0.0
    %243 = vmatpush1.msra.mxu0 %v216
    %244 = vmatprep.subr.mxu0 0.0
    %245 = vmatpush1.msra.mxu0 %v217
    %246 = vmatprep.subr.mxu0 0.0
    %247 = vmatpush1.msra.mxu0 %v218
    %248 = vmatprep.subr.mxu0 0.0
    %249 = vmatpush1.msra.mxu0 %v219
    %250 = vmatprep.subr.mxu0 0.0
    %251 = vmatpush1.msra.mxu0 %v220
    %252 = vmatprep.subr.mxu0 0.0
    %253 = vmatpush1.msra.mxu0 %v221
    %254 = vmatprep.subr.mxu0 0.0
    %255 = vmatpush1.msra.mxu0 %v222
    %256 = vmatprep.subr.mxu0 0.0
    %257 = vmatpush1.msra.mxu0 0.0
    %258 = vmatprep.subr.mxu0 0.0
    %259 = vmatpush1.msra.mxu0 0.0
    %260 = vmatprep.subr.mxu0 0.0
    %261 = vmatpush1.msra.mxu0 0.0
    %262 = vmatprep.subr.mxu0 0.0
    %263 = vmatpush1.msra.mxu0 0.0
    %264 = vmatprep.subr.mxu0 0.0
    %265 = vmatpush1.msra.mxu0 0.0
    %266 = vmatprep.subr.mxu0 0.0
    %267 = vmatpush1.msra.mxu0 0.0
    %268 = vmatprep.subr.mxu0 0.0
    %269 = vmatpush1.msra.mxu0 0.0
    %270 = vmatprep.subr.mxu0 0.0
    %271 = vmatpush1.msra.mxu0 0.0
    %272 = vmatprep.subr.mxu0 0.0
    %273 = vmatpush1.msra.mxu0 0.0
    %274 = vmatprep.subr.mxu0 0.0
    %275 = vmatpush1.msra.mxu0 0.0
    %276 = vmatprep.subr.mxu0 0.0
    %277 = vmatpush1.msra.mxu0 0.0
    %278 = vmatprep.subr.mxu0 0.0
    %279 = vmatpush1.msra.mxu0 0.0
    %280 = vmatprep.subr.mxu0 0.0
    %281 = vmatpush1.msra.mxu0 0.0
    %282 = vmatprep.subr.mxu0 0.0
    %283 = vmatpush1.msra.mxu0 0.0
    %284 = vmatprep.subr.mxu0 0.0
    %285 = vmatpush1.msra.mxu0 0.0
    %286 = vmatprep.subr.mxu0 0.0
    %287 = vmatpush1.msra.mxu0 0.0
    %288 = vmatprep.mubr.f32.mxu0 0.0
    %289 = vmatmul.mubr.f32.gmra.mrb[0].mxu0 0.0
    %v290 = vpop.f32.mrb[0].mxu0
    %v291 = vadd.f32 0.0, %v290
    %v292 = vpop.f32.mrb[0].mxu0
    %293 = vdwg.mxu0
    %v294 = vadd.f32 %v223, %v291
    %v295 = vtanh.pop %v294
    %s296 = scalar_lea.vmem [#allocation2], 8
    %v297 = vld [vmem:[%s296] sm:$0xff]
    %298 = vmatprep.subr.mxu0 0.0
    %299 = vmatpush1.msra.mxu0 %v207
    %300 = vmatprep.subr.mxu0 0.0
    %301 = vmatpush1.msra.mxu0 %v208
    %302 = vmatprep.subr.mxu0 0.0
    %303 = vmatpush1.msra.mxu0 %v209
    %304 = vmatprep.subr.mxu0 0.0
    %305 = vmatpush1.msra.mxu0 %v210
    %306 = vmatprep.subr.mxu0 0.0
    %307 = vmatpush1.msra.mxu0 %v211
    %308 = vmatprep.subr.mxu0 0.0
    %309 = vmatpush1.msra.mxu0 %v212
    %310 = vmatprep.subr.mxu0 0.0
    %311 = vmatpush1.msra.mxu0 %v213
    %312 = vmatprep.subr.mxu0 0.0
    %313 = vmatpush1.msra.mxu0 %v214
    %314 = vmatprep.subr.mxu0 0.0
    %315 = vmatpush1.msra.mxu0 %v215
    %316 = vmatprep.subr.mxu0 0.0
    %317 = vmatpush1.msra.mxu0 %v216
    %318 = vmatprep.subr.mxu0 0.0
    %319 = vmatpush1.msra.mxu0 %v217
    %320 = vmatprep.subr.mxu0 0.0
    %321 = vmatpush1.msra.mxu0 %v218
    %322 = vmatprep.subr.mxu0 0.0
    %323 = vmatpush1.msra.mxu0 %v219
    %324 = vmatprep.subr.mxu0 0.0
    %325 = vmatpush1.msra.mxu0 %v220
    %326 = vmatprep.subr.mxu0 0.0
    %327 = vmatpush1.msra.mxu0 %v221
    %328 = vmatprep.subr.mxu0 0.0
    %329 = vmatpush1.msra.mxu0 %v222
    %330 = vmatprep.subr.mxu0 0.0
    %331 = vmatpush1.msra.mxu0 0.0
    %332 = vmatprep.subr.mxu0 0.0
    %333 = vmatpush1.msra.mxu0 0.0
    %334 = vmatprep.subr.mxu0 0.0
    %335 = vmatpush1.msra.mxu0 0.0
    %336 = vmatprep.subr.mxu0 0.0
    %337 = vmatpush1.msra.mxu0 0.0
    %338 = vmatprep.subr.mxu0 0.0
    %339 = vmatpush1.msra.mxu0 0.0
    %340 = vmatprep.subr.mxu0 0.0
    %341 = vmatpush1.msra.mxu0 0.0
    %342 = vmatprep.subr.mxu0 0.0
    %343 = vmatpush1.msra.mxu0 0.0
    %344 = vmatprep.subr.mxu0 0.0
    %345 = vmatpush1.msra.mxu0 0.0
    %346 = vmatprep.subr.mxu0 0.0
    %347 = vmatpush1.msra.mxu0 0.0
    %348 = vmatprep.subr.mxu0 0.0
    %349 = vmatpush1.msra.mxu0 0.0
    %350 = vmatprep.subr.mxu0 0.0
    %351 = vmatpush1.msra.mxu0 0.0
    %352 = vmatprep.subr.mxu0 0.0
    %353 = vmatpush1.msra.mxu0 0.0
    %354 = vmatprep.subr.mxu0 0.0
    %355 = vmatpush1.msra.mxu0 0.0
    %356 = vmatprep.subr.mxu0 0.0
    %357 = vmatpush1.msra.mxu0 0.0
    %358 = vmatprep.subr.mxu0 0.0
    %359 = vmatpush1.msra.mxu0 0.0
    %360 = vmatprep.subr.mxu0 0.0
    %361 = vmatpush1.msra.mxu0 0.0
    %362 = vmatprep.mubr.f32.mxu0 0.0
    %363 = vmatmul.mubr.f32.gmra.mrb[0].mxu0 %v295
    %v364 = vpop.f32.mrb[0].mxu0
    %v365 = vadd.f32 0.0, %v364
    %v366 = vpop.f32.mrb[0].mxu0
    %367 = vdwg.mxu0
    %v368 = vadd.f32 %v297, %v365
    %v369 = vtanh.pop %v368
    %s370 = scalar_lea.vmem [#allocation2], 16
    %v371 = vld [vmem:[%s370] sm:$0xff]
    %372 = vmatprep.subr.mxu0 0.0
    %373 = vmatpush1.msra.mxu0 %v207
    %374 = vmatprep.subr.mxu0 0.0
    %375 = vmatpush1.msra.mxu0 %v208
    %376 = vmatprep.subr.mxu0 0.0
    %377 = vmatpush1.msra.mxu0 %v209
    %378 = vmatprep.subr.mxu0 0.0
    %379 = vmatpush1.msra.mxu0 %v210
    %380 = vmatprep.subr.mxu0 0.0
    %381 = vmatpush1.msra.mxu0 %v211
    %382 = vmatprep.subr.mxu0 0.0
    %383 = vmatpush1.msra.mxu0 %v212
    %384 = vmatprep.subr.mxu0 0.0
    %385 = vmatpush1.msra.mxu0 %v213
    %386 = vmatprep.subr.mxu0 0.0
    %387 = vmatpush1.msra.mxu0 %v214
    %388 = vmatprep.subr.mxu0 0.0
    %389 = vmatpush1.msra.mxu0 %v215
    %390 = vmatprep.subr.mxu0 0.0
    %391 = vmatpush1.msra.mxu0 %v216
    %392 = vmatprep.subr.mxu0 0.0
    %393 = vmatpush1.msra.mxu0 %v217
    %394 = vmatprep.subr.mxu0 0.0
    %395 = vmatpush1.msra.mxu0 %v218
    %396 = vmatprep.subr.mxu0 0.0
    %397 = vmatpush1.msra.mxu0 %v219
    %398 = vmatprep.subr.mxu0 0.0
    %399 = vmatpush1.msra.mxu0 %v220
    %400 = vmatprep.subr.mxu0 0.0
    %401 = vmatpush1.msra.mxu0 %v221
    %402 = vmatprep.subr.mxu0 0.0
    %403 = vmatpush1.msra.mxu0 %v222
    %404 = vmatprep.subr.mxu0 0.0
    %405 = vmatpush1.msra.mxu0 0.0
    %406 = vmatprep.subr.mxu0 0.0
    %407 = vmatpush1.msra.mxu0 0.0
    %408 = vmatprep.subr.mxu0 0.0
    %409 = vmatpush1.msra.mxu0 0.0
    %410 = vmatprep.subr.mxu0 0.0
    %411 = vmatpush1.msra.mxu0 0.0
    %412 = vmatprep.subr.mxu0 0.0
    %413 = vmatpush1.msra.mxu0 0.0
    %414 = vmatprep.subr.mxu0 0.0
    %415 = vmatpush1.msra.mxu0 0.0
    %416 = vmatprep.subr.mxu0 0.0
    %417 = vmatpush1.msra.mxu0 0.0
    %418 = vmatprep.subr.mxu0 0.0
    %419 = vmatpush1.msra.mxu0 0.0
    %420 = vmatprep.subr.mxu0 0.0
    %421 = vmatpush1.msra.mxu0 0.0
    %422 = vmatprep.subr.mxu0 0.0
    %423 = vmatpush1.msra.mxu0 0.0
    %424 = vmatprep.subr.mxu0 0.0
    %425 = vmatpush1.msra.mxu0 0.0
    %426 = vmatprep.subr.mxu0 0.0
    %427 = vmatpush1.msra.mxu0 0.0
    %428 = vmatprep.subr.mxu0 0.0
    %429 = vmatpush1.msra.mxu0 0.0
    %430 = vmatprep.subr.mxu0 0.0
    %431 = vmatpush1.msra.mxu0 0.0
    %432 = vmatprep.subr.mxu0 0.0
    %433 = vmatpush1.msra.mxu0 0.0
    %434 = vmatprep.subr.mxu0 0.0
    %435 = vmatpush1.msra.mxu0 0.0
    %436 = vmatprep.mubr.f32.mxu0 0.0
    %437 = vmatmul.mubr.f32.gmra.mrb[0].mxu0 %v369
    %v438 = vpop.f32.mrb[0].mxu0
    %v439 = vadd.f32 0.0, %v438
    %v440 = vpop.f32.mrb[0].mxu0
    %441 = vdwg.mxu0
    %v442 = vadd.f32 %v371, %v439
    %v443 = vtanh.pop %v442
    %s444 = scalar_lea.vmem [#allocation2], 24
    %v445 = vld [vmem:[%s444] sm:$0xff]
    %446 = vmatprep.subr.mxu0 0.0
    %447 = vmatpush1.msra.mxu0 %v207
    %448 = vmatprep.subr.mxu0 0.0
    %449 = vmatpush1.msra.mxu0 %v208
    %450 = vmatprep.subr.mxu0 0.0
    %451 = vmatpush1.msra.mxu0 %v209
    %452 = vmatprep.subr.mxu0 0.0
    %453 = vmatpush1.msra.mxu0 %v210
    %454 = vmatprep.subr.mxu0 0.0
    %455 = vmatpush1.msra.mxu0 %v211
    %456 = vmatprep.subr.mxu0 0.0
    %457 = vmatpush1.msra.mxu0 %v212
    %458 = vmatprep.subr.mxu0 0.0
    %459 = vmatpush1.msra.mxu0 %v213
    %460 = vmatprep.subr.mxu0 0.0
    %461 = vmatpush1.msra.mxu0 %v214
    %462 = vmatprep.subr.mxu0 0.0
    %463 = vmatpush1.msra.mxu0 %v215
    %464 = vmatprep.subr.mxu0 0.0
    %465 = vmatpush1.msra.mxu0 %v216
    %466 = vmatprep.subr.mxu0 0.0
    %467 = vmatpush1.msra.mxu0 %v217
    %468 = vmatprep.subr.mxu0 0.0
    %469 = vmatpush1.msra.mxu0 %v218
    %470 = vmatprep.subr.mxu0 0.0
    %471 = vmatpush1.msra.mxu0 %v219
    %472 = vmatprep.subr.mxu0 0.0
    %473 = vmatpush1.msra.mxu0 %v220
    %474 = vmatprep.subr.mxu0 0.0
    %475 = vmatpush1.msra.mxu0 %v221
    %476 = vmatprep.subr.mxu0 0.0
    %477 = vmatpush1.msra.mxu0 %v222
    %478 = vmatprep.subr.mxu0 0.0
    %479 = vmatpush1.msra.mxu0 0.0
    %480 = vmatprep.subr.mxu0 0.0
    %481 = vmatpush1.msra.mxu0 0.0
    %482 = vmatprep.subr.mxu0 0.0
    %483 = vmatpush1.msra.mxu0 0.0
    %484 = vmatprep.subr.mxu0 0.0
    %485 = vmatpush1.msra.mxu0 0.0
    %486 = vmatprep.subr.mxu0 0.0
    %487 = vmatpush1.msra.mxu0 0.0
    %488 = vmatprep.subr.mxu0 0.0
    %489 = vmatpush1.msra.mxu0 0.0
    %490 = vmatprep.subr.mxu0 0.0
    %491 = vmatpush1.msra.mxu0 0.0
    %492 = vmatprep.subr.mxu0 0.0
    %493 = vmatpush1.msra.mxu0 0.0
    %494 = vmatprep.subr.mxu0 0.0
    %495 = vmatpush1.msra.mxu0 0.0
    %496 = vmatprep.subr.mxu0 0.0
    %497 = vmatpush1.msra.mxu0 0.0
    %498 = vmatprep.subr.mxu0 0.0
    %499 = vmatpush1.msra.mxu0 0.0
    %500 = vmatprep.subr.mxu0 0.0
    %501 = vmatpush1.msra.mxu0 0.0
    %502 = vmatprep.subr.mxu0 0.0
    %503 = vmatpush1.msra.mxu0 0.0
    %504 = vmatprep.subr.mxu0 0.0
    %505 = vmatpush1.msra.mxu0 0.0
    %506 = vmatprep.subr.mxu0 0.0
    %507 = vmatpush1.msra.mxu0 0.0
    %508 = vmatprep.subr.mxu0 0.0
    %509 = vmatpush1.msra.mxu0 0.0
    %510 = vmatprep.mubr.f32.mxu0 0.0
    %511 = vmatmul.mubr.f32.gmra.mrb[0].mxu0 %v443
    %v512 = vpop.f32.mrb[0].mxu0
    %v513 = vadd.f32 0.0, %v512
    %v514 = vpop.f32.mrb[0].mxu0
    %515 = vdwg.mxu0
    %v516 = vadd.f32 %v445, %v513
    %v517 = vtanh.pop %v516
    %s518 = scalar_lea.vmem [#allocation2], 32
    %v519 = vld [vmem:[%s518] sm:$0xff]
    %520 = vmatprep.subr.mxu0 0.0
    %521 = vmatpush1.msra.mxu0 %v207
    %522 = vmatprep.subr.mxu0 0.0
    %523 = vmatpush1.msra.mxu0 %v208
    %524 = vmatprep.subr.mxu0 0.0
    %525 = vmatpush1.msra.mxu0 %v209
    %526 = vmatprep.subr.mxu0 0.0
    %527 = vmatpush1.msra.mxu0 %v210
    %528 = vmatprep.subr.mxu0 0.0
    %529 = vmatpush1.msra.mxu0 %v211
    %530 = vmatprep.subr.mxu0 0.0
    %531 = vmatpush1.msra.mxu0 %v212
    %532 = vmatprep.subr.mxu0 0.0
    %533 = vmatpush1.msra.mxu0 %v213
    %534 = vmatprep.subr.mxu0 0.0
    %535 = vmatpush1.msra.mxu0 %v214
    %536 = vmatprep.subr.mxu0 0.0
    %537 = vmatpush1.msra.mxu0 %v215
    %538 = vmatprep.subr.mxu0 0.0
    %539 = vmatpush1.msra.mxu0 %v216
    %540 = vmatprep.subr.mxu0 0.0
    %541 = vmatpush1.msra.mxu0 %v217
    %542 = vmatprep.subr.mxu0 0.0
    %543 = vmatpush1.msra.mxu0 %v218
    %544 = vmatprep.subr.mxu0 0.0
    %545 = vmatpush1.msra.mxu0 %v219
    %546 = vmatprep.subr.mxu0 0.0
    %547 = vmatpush1.msra.mxu0 %v220
    %548 = vmatprep.subr.mxu0 0.0
    %549 = vmatpush1.msra.mxu0 %v221
    %550 = vmatprep.subr.mxu0 0.0
    %551 = vmatpush1.msra.mxu0 %v222
    %552 = vmatprep.subr.mxu0 0.0
    %553 = vmatpush1.msra.mxu0 0.0
    %554 = vmatprep.subr.mxu0 0.0
    %555 = vmatpush1.msra.mxu0 0.0
    %556 = vmatprep.subr.mxu0 0.0
    %557 = vmatpush1.msra.mxu0 0.0
    %558 = vmatprep.subr.mxu0 0.0
    %559 = vmatpush1.msra.mxu0 0.0
    %560 = vmatprep.subr.mxu0 0.0
    %561 = vmatpush1.msra.mxu0 0.0
    %562 = vmatprep.subr.mxu0 0.0
    %563 = vmatpush1.msra.mxu0 0.0
    %564 = vmatprep.subr.mxu0 0.0
    %565 = vmatpush1.msra.mxu0 0.0
    %566 = vmatprep.subr.mxu0 0.0
    %567 = vmatpush1.msra.mxu0 0.0
    %568 = vmatprep.subr.mxu0 0.0
    %569 = vmatpush1.msra.mxu0 0.0
    %570 = vmatprep.subr.mxu0 0.0
    %571 = vmatpush1.msra.mxu0 0.0
    %572 = vmatprep.subr.mxu0 0.0
    %573 = vmatpush1.msra.mxu0 0.0
    %574 = vmatprep.subr.mxu0 0.0
    %575 = vmatpush1.msra.mxu0 0.0
    %576 = vmatprep.subr.mxu0 0.0
    %577 = vmatpush1.msra.mxu0 0.0
    %578 = vmatprep.subr.mxu0 0.0
    %579 = vmatpush1.msra.mxu0 0.0
    %580 = vmatprep.subr.mxu0 0.0
    %581 = vmatpush1.msra.mxu0 0.0
    %582 = vmatprep.subr.mxu0 0.0
    %583 = vmatpush1.msra.mxu0 0.0
    %584 = vmatprep.mubr.f32.mxu0 0.0
    %585 = vmatmul.mubr.f32.gmra.mrb[0].mxu0 %v517
    %v586 = vpop.f32.mrb[0].mxu0
    %v587 = vadd.f32 0.0, %v586
    %v588 = vpop.f32.mrb[0].mxu0
    %589 = vdwg.mxu0
    %v590 = vadd.f32 %v519, %v587
    %v591 = vtanh.pop %v590
    %s592 = scalar_lea.vmem [#allocation2], 40
    %v593 = vld [vmem:[%s592] sm:$0xff]
    %594 = vmatprep.subr.mxu0 0.0
    %595 = vmatpush1.msra.mxu0 %v207
    %596 = vmatprep.subr.mxu0 0.0
    %597 = vmatpush1.msra.mxu0 %v208
    %598 = vmatprep.subr.mxu0 0.0
    %599 = vmatpush1.msra.mxu0 %v209
    %600 = vmatprep.subr.mxu0 0.0
    %601 = vmatpush1.msra.mxu0 %v210
    %602 = vmatprep.subr.mxu0 0.0
    %603 = vmatpush1.msra.mxu0 %v211
    %604 = vmatprep.subr.mxu0 0.0
    %605 = vmatpush1.msra.mxu0 %v212
    %606 = vmatprep.subr.mxu0 0.0
    %607 = vmatpush1.msra.mxu0 %v213
    %608 = vmatprep.subr.mxu0 0.0
    %609 = vmatpush1.msra.mxu0 %v214
    %610 = vmatprep.subr.mxu0 0.0
    %611 = vmatpush1.msra.mxu0 %v215
    %612 = vmatprep.subr.mxu0 0.0
    %613 = vmatpush1.msra.mxu0 %v216
    %614 = vmatprep.subr.mxu0 0.0
    %615 = vmatpush1.msra.mxu0 %v217
    %616 = vmatprep.subr.mxu0 0.0
    %617 = vmatpush1.msra.mxu0 %v218
    %618 = vmatprep.subr.mxu0 0.0
    %619 = vmatpush1.msra.mxu0 %v219
    %620 = vmatprep.subr.mxu0 0.0
    %621 = vmatpush1.msra.mxu0 %v220
    %622 = vmatprep.subr.mxu0 0.0
    %623 = vmatpush1.msra.mxu0 %v221
    %624 = vmatprep.subr.mxu0 0.0
    %625 = vmatpush1.msra.mxu0 %v222
    %626 = vmatprep.subr.mxu0 0.0
    %627 = vmatpush1.msra.mxu0 0.0
    %628 = vmatprep.subr.mxu0 0.0
    %629 = vmatpush1.msra.mxu0 0.0
    %630 = vmatprep.subr.mxu0 0.0
    %631 = vmatpush1.msra.mxu0 0.0
    %632 = vmatprep.subr.mxu0 0.0
    %633 = vmatpush1.msra.mxu0 0.0
    %634 = vmatprep.subr.mxu0 0.0
    %635 = vmatpush1.msra.mxu0 0.0
    %636 = vmatprep.subr.mxu0 0.0
    %637 = vmatpush1.msra.mxu0 0.0
    %638 = vmatprep.subr.mxu0 0.0
    %639 = vmatpush1.msra.mxu0 0.0
    %640 = vmatprep.subr.mxu0 0.0
    %641 = vmatpush1.msra.mxu0 0.0
    %642 = vmatprep.subr.mxu0 0.0
    %643 = vmatpush1.msra.mxu0 0.0
    %644 = vmatprep.subr.mxu0 0.0
    %645 = vmatpush1.msra.mxu0 0.0
    %646 = vmatprep.subr.mxu0 0.0
    %647 = vmatpush1.msra.mxu0 0.0
    %648 = vmatprep.subr.mxu0 0.0
    %649 = vmatpush1.msra.mxu0 0.0
    %650 = vmatprep.subr.mxu0 0.0
    %651 = vmatpush1.msra.mxu0 0.0
    %652 = vmatprep.subr.mxu0 0.0
    %653 = vmatpush1.msra.mxu0 0.0
    %654 = vmatprep.subr.mxu0 0.0
    %655 = vmatpush1.msra.mxu0 0.0
    %656 = vmatprep.subr.mxu0 0.0
    %657 = vmatpush1.msra.mxu0 0.0
    %658 = vmatprep.mubr.f32.mxu0 0.0
    %659 = vmatmul.mubr.f32.gmra.mrb[0].mxu0 %v591
    %v660 = vpop.f32.mrb[0].mxu0
    %v661 = vadd.f32 0.0, %v660
    %v662 = vpop.f32.mrb[0].mxu0
    %663 = vdwg.mxu0
    %v664 = vadd.f32 %v593, %v661
    %v665 = vtanh.pop %v664
    %s666 = scalar_lea.vmem [#allocation2], 48
    %v667 = vld [vmem:[%s666] sm:$0xff]
    %668 = vmatprep.subr.mxu0 0.0
    %669 = vmatpush1.msra.mxu0 %v207
    %670 = vmatprep.subr.mxu0 0.0
    %671 = vmatpush1.msra.mxu0 %v208
    %672 = vmatprep.subr.mxu0 0.0
    %673 = vmatpush1.msra.mxu0 %v209
    %674 = vmatprep.subr.mxu0 0.0
    %675 = vmatpush1.msra.mxu0 %v210
    %676 = vmatprep.subr.mxu0 0.0
    %677 = vmatpush1.msra.mxu0 %v211
    %678 = vmatprep.subr.mxu0 0.0
    %679 = vmatpush1.msra.mxu0 %v212
    %680 = vmatprep.subr.mxu0 0.0
    %681 = vmatpush1.msra.mxu0 %v213
    %682 = vmatprep.subr.mxu0 0.0
    %683 = vmatpush1.msra.mxu0 %v214
    %684 = vmatprep.subr.mxu0 0.0
    %685 = vmatpush1.msra.mxu0 %v215
    %686 = vmatprep.subr.mxu0 0.0
    %687 = vmatpush1.msra.mxu0 %v216
    %688 = vmatprep.subr.mxu0 0.0
    %689 = vmatpush1.msra.mxu0 %v217
    %690 = vmatprep.subr.mxu0 0.0
    %691 = vmatpush1.msra.mxu0 %v218
    %692 = vmatprep.subr.mxu0 0.0
    %693 = vmatpush1.msra.mxu0 %v219
    %694 = vmatprep.subr.mxu0 0.0
    %695 = vmatpush1.msra.mxu0 %v220
    %696 = vmatprep.subr.mxu0 0.0
    %697 = vmatpush1.msra.mxu0 %v221
    %698 = vmatprep.subr.mxu0 0.0
    %699 = vmatpush1.msra.mxu0 %v222
    %700 = vmatprep.subr.mxu0 0.0
    %701 = vmatpush1.msra.mxu0 0.0
    %702 = vmatprep.subr.mxu0 0.0
    %703 = vmatpush1.msra.mxu0 0.0
    %704 = vmatprep.subr.mxu0 0.0
    %705 = vmatpush1.msra.mxu0 0.0
    %706 = vmatprep.subr.mxu0 0.0
    %707 = vmatpush1.msra.mxu0 0.0
    %708 = vmatprep.subr.mxu0 0.0
    %709 = vmatpush1.msra.mxu0 0.0
    %710 = vmatprep.subr.mxu0 0.0
    %711 = vmatpush1.msra.mxu0 0.0
    %712 = vmatprep.subr.mxu0 0.0
    %713 = vmatpush1.msra.mxu0 0.0
    %714 = vmatprep.subr.mxu0 0.0
    %715 = vmatpush1.msra.mxu0 0.0
    %716 = vmatprep.subr.mxu0 0.0
    %717 = vmatpush1.msra.mxu0 0.0
    %718 = vmatprep.subr.mxu0 0.0
    %719 = vmatpush1.msra.mxu0 0.0
    %720 = vmatprep.subr.mxu0 0.0
    %721 = vmatpush1.msra.mxu0 0.0
    %722 = vmatprep.subr.mxu0 0.0
    %723 = vmatpush1.msra.mxu0 0.0
    %724 = vmatprep.subr.mxu0 0.0
    %725 = vmatpush1.msra.mxu0 0.0
    %726 = vmatprep.subr.mxu0 0.0
    %727 = vmatpush1.msra.mxu0 0.0
    %728 = vmatprep.subr.mxu0 0.0
    %729 = vmatpush1.msra.mxu0 0.0
    %730 = vmatprep.subr.mxu0 0.0
    %731 = vmatpush1.msra.mxu0 0.0
    %732 = vmatprep.mubr.f32.mxu0 0.0
    %733 = vmatmul.mubr.f32.gmra.mrb[0].mxu0 %v665
    %v734 = vpop.f32.mrb[0].mxu0
    %v735 = vadd.f32 0.0, %v734
    %v736 = vpop.f32.mrb[0].mxu0
    %737 = vdwg.mxu0
    %v738 = vadd.f32 %v667, %v735
    %v739 = vtanh.pop %v738
    %s740 = scalar_lea.vmem [#allocation2], 56
    %v741 = vld [vmem:[%s740] sm:$0xff]
    %742 = vmatprep.subr.mxu0 0.0
    %743 = vmatpush1.msra.mxu0 %v207
    %744 = vmatprep.subr.mxu0 0.0
    %745 = vmatpush1.msra.mxu0 %v208
    %746 = vmatprep.subr.mxu0 0.0
    %747 = vmatpush1.msra.mxu0 %v209
    %748 = vmatprep.subr.mxu0 0.0
    %749 = vmatpush1.msra.mxu0 %v210
    %750 = vmatprep.subr.mxu0 0.0
    %751 = vmatpush1.msra.mxu0 %v211
    %752 = vmatprep.subr.mxu0 0.0
    %753 = vmatpush1.msra.mxu0 %v212
    %754 = vmatprep.subr.mxu0 0.0
    %755 = vmatpush1.msra.mxu0 %v213
    %756 = vmatprep.subr.mxu0 0.0
    %757 = vmatpush1.msra.mxu0 %v214
    %758 = vmatprep.subr.mxu0 0.0
    %759 = vmatpush1.msra.mxu0 %v215
    %760 = vmatprep.subr.mxu0 0.0
    %761 = vmatpush1.msra.mxu0 %v216
    %762 = vmatprep.subr.mxu0 0.0
    %763 = vmatpush1.msra.mxu0 %v217
    %764 = vmatprep.subr.mxu0 0.0
    %765 = vmatpush1.msra.mxu0 %v218
    %766 = vmatprep.subr.mxu0 0.0
    %767 = vmatpush1.msra.mxu0 %v219
    %768 = vmatprep.subr.mxu0 0.0
    %769 = vmatpush1.msra.mxu0 %v220
    %770 = vmatprep.subr.mxu0 0.0
    %771 = vmatpush1.msra.mxu0 %v221
    %772 = vmatprep.subr.mxu0 0.0
    %773 = vmatpush1.msra.mxu0 %v222
    %774 = vmatprep.subr.mxu0 0.0
    %775 = vmatpush1.msra.mxu0 0.0
    %776 = vmatprep.subr.mxu0 0.0
    %777 = vmatpush1.msra.mxu0 0.0
    %778 = vmatprep.subr.mxu0 0.0
    %779 = vmatpush1.msra.mxu0 0.0
    %780 = vmatprep.subr.mxu0 0.0
    %781 = vmatpush1.msra.mxu0 0.0
    %782 = vmatprep.subr.mxu0 0.0
    %783 = vmatpush1.msra.mxu0 0.0
    %784 = vmatprep.subr.mxu0 0.0
    %785 = vmatpush1.msra.mxu0 0.0
    %786 = vmatprep.subr.mxu0 0.0
    %787 = vmatpush1.msra.mxu0 0.0
    %788 = vmatprep.subr.mxu0 0.0
    %789 = vmatpush1.msra.mxu0 0.0
    %790 = vmatprep.subr.mxu0 0.0
    %791 = vmatpush1.msra.mxu0 0.0
    %792 = vmatprep.subr.mxu0 0.0
    %793 = vmatpush1.msra.mxu0 0.0
    %794 = vmatprep.subr.mxu0 0.0
    %795 = vmatpush1.msra.mxu0 0.0
    %796 = vmatprep.subr.mxu0 0.0
    %797 = vmatpush1.msra.mxu0 0.0
    %798 = vmatprep.subr.mxu0 0.0
    %799 = vmatpush1.msra.mxu0 0.0
    %800 = vmatprep.subr.mxu0 0.0
    %801 = vmatpush1.msra.mxu0 0.0
    %802 = vmatprep.subr.mxu0 0.0
    %803 = vmatpush1.msra.mxu0 0.0
    %804 = vmatprep.subr.mxu0 0.0
    %805 = vmatpush1.msra.mxu0 0.0
    %806 = vmatprep.mubr.f32.mxu0 0.0
    %807 = vmatmul.mubr.f32.gmra.mrb[0].mxu0 %v739
    %v808 = vpop.f32.mrb[0].mxu0
    %v809 = vadd.f32 0.0, %v808
    %v810 = vpop.f32.mrb[0].mxu0
    %811 = vdwg.mxu0
    %v812 = vadd.f32 %v741, %v809
    %v813 = vtanh.pop %v812
    %v814 = vld [vmem:[#allocation6] sm:$0xff]
    %v815 = vld [vmem:[#allocation6 + $0x8] sm:$0xff]
    %v816 = vld [vmem:[#allocation6 + $0x10] sm:$0xff]
    %v817 = vld [vmem:[#allocation6 + $0x18] sm:$0xff]
    %v818 = vld [vmem:[#allocation6 + $0x20] sm:$0xff]
    %v819 = vld [vmem:[#allocation6 + $0x28] sm:$0xff]
    %v820 = vld [vmem:[#allocation6 + $0x30] sm:$0xff]
    %v821 = vld [vmem:[#allocation6 + $0x38] sm:$0xff]
    %v822 = vld [vmem:[#allocation6 + $0x40] sm:$0xff]
    %v823 = vld [vmem:[#allocation6 + $0x48] sm:$0xff]
    %v824 = vld [vmem:[#allocation6 + $0x50] sm:$0xff]
    %v825 = vld [vmem:[#allocation6 + $0x58] sm:$0xff]
    %v826 = vld [vmem:[#allocation6 + $0x60] sm:$0xff]
    %v827 = vld [vmem:[#allocation6 + $0x68] sm:$0xff]
    %v828 = vld [vmem:[#allocation6 + $0x70] sm:$0xff]
    %v829 = vld [vmem:[#allocation6 + $0x78] sm:$0xff]
    %v830 = vld [vmem:[%s5] sm:$0x1]
    %v832 = vlaneseq
    %v833 = vshrl.u32 %v832, 7
    %v834 = vsub.s32 0, %v833
    %v835 = vrot.slane %v830, %v834
    %837 = vmatprep.subr.mxu0 0.0
    %838 = vmatpush1.msra.mxu0 %v814
    %839 = vmatprep.subr.mxu0 0.0
    %840 = vmatpush1.msra.mxu0 %v815
    %841 = vmatprep.subr.mxu0 0.0
    %842 = vmatpush1.msra.mxu0 %v816
    %843 = vmatprep.subr.mxu0 0.0
    %844 = vmatpush1.msra.mxu0 %v817
    %845 = vmatprep.subr.mxu0 0.0
    %846 = vmatpush1.msra.mxu0 %v818
    %847 = vmatprep.subr.mxu0 0.0
    %848 = vmatpush1.msra.mxu0 %v819
    %849 = vmatprep.subr.mxu0 0.0
    %850 = vmatpush1.msra.mxu0 %v820
    %851 = vmatprep.subr.mxu0 0.0
    %852 = vmatpush1.msra.mxu0 %v821
    %853 = vmatprep.subr.mxu0 0.0
    %854 = vmatpush1.msra.mxu0 %v822
    %855 = vmatprep.subr.mxu0 0.0
    %856 = vmatpush1.msra.mxu0 %v823
    %857 = vmatprep.subr.mxu0 0.0
    %858 = vmatpush1.msra.mxu0 %v824
    %859 = vmatprep.subr.mxu0 0.0
    %860 = vmatpush1.msra.mxu0 %v825
    %861 = vmatprep.subr.mxu0 0.0
    %862 = vmatpush1.msra.mxu0 %v826
    %863 = vmatprep.subr.mxu0 0.0
    %864 = vmatpush1.msra.mxu0 %v827
    %865 = vmatprep.subr.mxu0 0.0
    %866 = vmatpush1.msra.mxu0 %v828
    %867 = vmatprep.subr.mxu0 0.0
    %868 = vmatpush1.msra.mxu0 %v829
    %869 = vmatprep.subr.mxu0 0.0
    %870 = vmatpush1.msra.mxu0 0.0
    %871 = vmatprep.subr.mxu0 0.0
    %872 = vmatpush1.msra.mxu0 0.0
    %873 = vmatprep.subr.mxu0 0.0
    %874 = vmatpush1.msra.mxu0 0.0
    %875 = vmatprep.subr.mxu0 0.0
    %876 = vmatpush1.msra.mxu0 0.0
    %877 = vmatprep.subr.mxu0 0.0
    %878 = vmatpush1.msra.mxu0 0.0
    %879 = vmatprep.subr.mxu0 0.0
    %880 = vmatpush1.msra.mxu0 0.0
    %881 = vmatprep.subr.mxu0 0.0
    %882 = vmatpush1.msra.mxu0 0.0
    %883 = vmatprep.subr.mxu0 0.0
    %884 = vmatpush1.msra.mxu0 0.0
    %885 = vmatprep.subr.mxu0 0.0
    %886 = vmatpush1.msra.mxu0 0.0
    %887 = vmatprep.subr.mxu0 0.0
    %888 = vmatpush1.msra.mxu0 0.0
    %889 = vmatprep.subr.mxu0 0.0
    %890 = vmatpush1.msra.mxu0 0.0
    %891 = vmatprep.subr.mxu0 0.0
    %892 = vmatpush1.msra.mxu0 0.0
    %893 = vmatprep.subr.mxu0 0.0
    %894 = vmatpush1.msra.mxu0 0.0
    %895 = vmatprep.subr.mxu0 0.0
    %896 = vmatpush1.msra.mxu0 0.0
    %897 = vmatprep.subr.mxu0 0.0
    %898 = vmatpush1.msra.mxu0 0.0
    %899 = vmatprep.subr.mxu0 0.0
    %900 = vmatpush1.msra.mxu0 0.0
    %901 = vmatprep.mubr.f32.mxu0 0.0
    %902 = vmatmul.mubr.f32.gmra.mrb[0].mxu0 %v813
    %v903 = vpop.f32.mrb[0].mxu0
    %v904 = vadd.f32 %v835, %v903
    %v905 = vpop.f32.mrb[0].mxu0
    %906 = vdwg.mxu0
    %907 = vst [vmem:[#allocation8] sm:$0xff] %v904
    // Predicated region
    $region34: #{tpu_custom_call.1} parent=1 // pred_check
      _
    $region35: #{tpu_custom_call.1} parent=1 // pred_check_branch
      %909 = sbr.rel (0) target = $region37
    $region36: #{tpu_custom_call.1} parent=1 // pred_region
      %s911 = ssub.s32 128, 128
      %912 = vsyncadd [#allocation5], %s911
      %s914 = sshll.u32 [#allocation8], 4
      %s915 = int_to_ptr.vmem [resolvable:$true] %s914
      %917 = dma.vmem_to_hbm [thread:$0]  %s915, 128, %s6, [#allocation5]
    $region37: #{tpu_custom_call.1} parent=1 // pred_fallthru
      _
    // Predicated region
    $region38: #{tpu_custom_call.1} parent=1 // pred_check
      _
    $region39: #{tpu_custom_call.1} parent=1 // pred_check_branch
      %919 = sbr.rel (0) target = $region41
    $region40: #{tpu_custom_call.1} parent=1 // pred_region
      %920 = dma.done [#allocation5], 128
    $region41: #{tpu_custom_call.1} parent=1 // pred_fallthru
      _
    %921 = vsyncpa [#allocation4], 1
    %922 = vsyncpa [#allocation7], 1
    %923 = vsyncpa [#allocation5], 1

</llo_original>
